<compile_context>
chip_gen: v5e
topology: v5e:2x2
jax: 0.10.0
libtpu: 0.0.40
codegen_flags: <defaults>
</compile_context>

<pallas_src>
import functools

import jax
import jax.numpy as jnp
from jax.experimental import pallas as pl
from jax.experimental.pallas import tpu as pltpu


def _round_up(x, m):
    return (x + m - 1) // m * m


def cnn_kernel(x_ref, wconv_ref, bconv_ref, w2_ref, b2_ref, out_ref, col_ref,
               *, filter_size, l_out, chunk):
    # x_ref     : (TB, S_halo, E)    bf16 embedded tokens (conv halo + chunk-tail zeros)
    # wconv_ref : (KE_p, F_p)        bf16 im2col conv weight (zero-padded rows)
    # bconv_ref : (1, F_p)           f32 conv bias
    # w2_ref    : (F_p, C_p)         bf16 linear weight (transposed)
    # b2_ref    : (1, C_p)           f32 linear bias (padded classes = -1e9)
    # out_ref   : (TB, C_p)          f32 log-probabilities
    # col_ref   : (TB, chunk, KE_p)  f32 VMEM scratch holding the im2col tile
    tb, s_halo, e = x_ref.shape
    ke_p, f_p = wconv_ref.shape
    ke = filter_size * e
    n_chunks = (s_halo - (filter_size - 1)) // chunk

    # Stage x in f32: slicing / lane-offset packing stays on the proven f32 layout
    # path; operands are cast back to bf16 right at the MXU dots.
    x = x_ref[...].astype(jnp.float32)

    # Zero the padded tail of the im2col contraction (scratch is uninitialized; the
    # matching weight rows are zero, but garbage*0 could produce NaN).
    if ke_p > ke:
        col_ref[:, :, ke:] = jnp.zeros((tb, chunk, ke_p - ke), jnp.float32)

    # Running global max-pool accumulator.  ReLU output is >= 0, so 0 is a safe
    # identity (masked chunk-tail positions also contribute 0).
    pooled = jnp.zeros((tb, f_p), jnp.float32)

    for c in range(n_chunks):                      # static unroll; n_chunks is small
        base = c * chunk
        # im2col: pack the K shifted windows along the contraction (lane) axis.
        for k in range(filter_size):
            col_ref[:, :, k * e:(k + 1) * e] = x[:, base + k:base + k + chunk, :]
        x_col = col_ref[...].reshape(tb * chunk, ke_p).astype(jnp.bfloat16)

        conv = jnp.dot(x_col, wconv_ref[...],
                       preferred_element_type=jnp.float32).reshape(tb, chunk, f_p)
        act = jnp.maximum(conv + bconv_ref[...], 0.0)          # f32 bias + ReLU

        if base + chunk > l_out:                   # static check: mask padded positions
            pos = base + jax.lax.broadcasted_iota(jnp.int32, (chunk, 1), 0)
            act = jnp.where(pos < l_out, act, 0.0)

        pooled = jnp.maximum(pooled, jnp.max(act, axis=1))     # running max-pool

    # Linear classifier + numerically-stable log_softmax.  Padded classes carry a
    # -1e9 f32 bias -> exp underflows to 0 and they don't perturb real classes.
    logits = jnp.dot(pooled.astype(jnp.bfloat16), w2_ref[...],
                     preferred_element_type=jnp.float32) + b2_ref[...]
    m = jnp.max(logits, axis=-1, keepdims=True)
    shifted = logits - m
    lse = jnp.log(jnp.sum(jnp.exp(shifted), axis=-1, keepdims=True))
    out_ref[...] = shifted - lse


def cnn_forward(inputs, emb, w_conv, b_conv, w_lin, b_lin, *,
                padding=1, block_b=None, seq_chunk=None):
    """Forward pass of the PyTorch CNN module.

    inputs : (B, S) int32 token ids
    emb    : (V, E)     nn.Embedding weight
    w_conv : (F, E, K)  nn.Conv1d weight (torch layout: out, in, kernel)
    b_conv : (F,)       nn.Conv1d bias
    w_lin  : (C, F)     nn.Linear weight (torch layout: out, in)
    b_lin  : (C,)       nn.Linear bias
    returns (B, C) f32 log-probabilities
    """
    B, S = inputs.shape
    _, E = emb.shape
    F, _, K = w_conv.shape
    C = w_lin.shape[0]

    l_out = S + 2 * padding - K + 1
    assert l_out >= 1, "sequence too short for this filter size / padding"

    F_p = _round_up(F, 128)
    C_p = _round_up(C, 128)
    KE = K * E
    KE_p = _round_up(KE, 128)

    # Sequence chunk for the fused conv -> ReLU -> running-max loop (multiple of 16
    # keeps sublane tiling friendly and bounds the per-chunk f32 live set).
    if seq_chunk is None:
        seq_chunk = min(_round_up(l_out, 16), 128)
    l_out_p = _round_up(l_out, seq_chunk)
    S_halo = l_out_p + K - 1

    # Batch tile: big enough to fill the MXU / amortize per-step overhead, capped by
    # a VMEM budget safe from v5e (16 MiB scoped default) through v7x (64 MiB phys).
    if block_b is None:
        per_row = 2 * (S_halo * E * 2) + seq_chunk * KE_p * 4   # 2x bf16 x-tile + f32 im2col scratch
        budget = 8 * 1024 * 1024
        block_b = int(max(8, min(256, (budget // per_row) // 8 * 8, _round_up(B, 8))))
    B_p = _round_up(B, block_b)

    # Embedding lookup: plain gather at the UNPADDED E, cast to bf16 (halves the
    # dominant HBM stream), then ONE pad for batch tile + conv halo + chunk tail.
    # TODO(synk): at large B*S, move the gather in-kernel (scalar-prefetch token ids
    # + manual DMA row gather) to remove this HBM round trip entirely.
    x = jnp.take(emb.astype(jnp.bfloat16), inputs, axis=0)                  # (B, S, E)
    x = jnp.pad(x, ((0, B_p - B), (padding, S_halo - S - padding), (0, 0)))

    # Conv weight (F, E, K) -> im2col matrix (K*E, F), zero-padded to (KE_p, F_p), bf16.
    wconv = jnp.transpose(w_conv, (2, 1, 0)).reshape(KE, F)
    wconv = jnp.pad(wconv, ((0, KE_p - KE), (0, F_p - F))).astype(jnp.bfloat16)
    bconv = jnp.pad(b_conv.astype(jnp.float32), (0, F_p - F)).reshape(1, F_p)

    # Linear weight -> (F_p, C_p) bf16; padded classes masked via a -1e9 *f32* bias.
    w2 = jnp.pad(w_lin.T, ((0, F_p - F), (0, C_p - C))).astype(jnp.bfloat16)
    b2 = jnp.pad(b_lin.astype(jnp.float32), (0, C_p - C))
    b2 = jnp.where(jnp.arange(C_p) < C, b2, -1e9).reshape(1, C_p)

    kernel = functools.partial(cnn_kernel, filter_size=K, l_out=l_out, chunk=seq_chunk)

    flops = 2 * B_p * l_out_p * KE_p * F_p + 2 * B_p * F_p * C_p
    bytes_accessed = (B_p * S_halo * E * 2 + KE_p * F_p * 2 + F_p * 4
                      + F_p * C_p * 2 + C_p * 4 + B_p * C_p * 4)
    cost = pl.CostEstimate(flops=flops, transcendentals=B_p * (C_p + 1),
                           bytes_accessed=bytes_accessed)

    grid = (B_p // block_b,)
    out = pl.pallas_call(
        kernel,
        out_shape=jax.ShapeDtypeStruct((B_p, C_p), jnp.float32),
        grid_spec=pltpu.PrefetchScalarGridSpec(
            num_scalar_prefetch=0,
            grid=grid,
            in_specs=[
                pl.BlockSpec((block_b, S_halo, E), lambda i: (i, 0, 0)),
                # TODO(synk): single-buffer these grid-invariant weight operands
                # (pl.Buffered(1) / whole-array VMEM placement) to reclaim VMEM for
                # larger batch tiles at production scale.
                pl.BlockSpec((KE_p, F_p), lambda i: (0, 0)),
                pl.BlockSpec((1, F_p), lambda i: (0, 0)),
                pl.BlockSpec((F_p, C_p), lambda i: (0, 0)),
                pl.BlockSpec((1, C_p), lambda i: (0, 0)),
            ],
            out_specs=pl.BlockSpec((block_b, C_p), lambda i: (i, 0)),
            scratch_shapes=[pltpu.VMEM((block_b, seq_chunk, KE_p), jnp.float32)],
        ),
        compiler_params=pltpu.CompilerParams(
            dimension_semantics=("parallel",),   # batch axis shards across TCs (v7x)
            vmem_limit_bytes=48 * 1024 * 1024,   # > 16/32 MiB defaults, < v7x 64 MiB phys
        ),
        cost_estimate=cost,
    )(x, wconv, bconv, w2, b2)

    return out[:B, :C]


def reference_forward(inputs, emb, w_conv, b_conv, w_lin, b_lin, padding=1):
    """Pure-JAX f32 reference mirroring the PyTorch module exactly."""
    x = emb[inputs]                                                   # (B, S, E)
    B, S, _ = x.shape
    F, _, K = w_conv.shape
    x_pad = jnp.pad(x, ((0, 0), (padding, padding), (0, 0)))
    L_out = S + 2 * padding - K + 1
    conv = jnp.zeros((B, L_out, F), jnp.float32)
    for k in range(K):
        conv = conv + jnp.einsum('bsc,fc->bsf', x_pad[:, k:k + L_out, :], w_conv[:, :, k])
    conv = conv + b_conv[None, None, :]
    act = jnp.maximum(conv, 0.0)
    pooled = jnp.max(act, axis=1)                                     # global max-pool
    logits = pooled @ w_lin.T + b_lin[None, :]
    return jax.nn.log_softmax(logits, axis=1)


if __name__ == "__main__":
    # Small shapes consistent with the module's forward.
    vocab_size = 32
    embedding_dim = 16
    filter_size = 3
    num_filter = 32
    num_class = 8
    batch = 2
    seq_len = 8

    key = jax.random.PRNGKey(0)
    k_emb, k_wc, k_bc, k_wl, k_bl, k_in = jax.random.split(key, 6)

    emb = jax.random.normal(k_emb, (vocab_size, embedding_dim), jnp.float32) * 0.1
    w_conv = jax.random.normal(k_wc, (num_filter, embedding_dim, filter_size), jnp.float32) * 0.1
    b_conv = jax.random.normal(k_bc, (num_filter,), jnp.float32) * 0.1
    w_lin = jax.random.normal(k_wl, (num_class, num_filter), jnp.float32) * 0.1
    b_lin = jax.random.normal(k_bl, (num_class,), jnp.float32) * 0.1

    inputs = jax.random.randint(k_in, (batch, seq_len), 0, vocab_size, jnp.int32)

    out = cnn_forward(inputs, emb, w_conv, b_conv, w_lin, b_lin, padding=1)
    out = jax.block_until_ready(out)

    ref = reference_forward(inputs, emb, w_conv, b_conv, w_lin, b_lin, padding=1)
    assert out.shape == (batch, num_class)
    # bf16 MXU operands with f32 accumulation -> loosened tolerance vs the f32 reference.
    assert jnp.allclose(out, ref, atol=2e-2, rtol=2e-2), "mismatch vs reference"

    print("KERNEL_OK")
</pallas_src>

<mosaic_0001>
module attributes {stable_mosaic.version = 11 : i64} {
  func.func @cnn_kernel(%arg0: i32, %arg1: memref<8x18x16xbf16, #tpu.memory_space<vmem>>, %arg2: memref<128x128xbf16, #tpu.memory_space<vmem>>, %arg3: memref<1x128xf32, #tpu.memory_space<vmem>>, %arg4: memref<128x128xbf16, #tpu.memory_space<vmem>>, %arg5: memref<1x128xf32, #tpu.memory_space<vmem>>, %arg6: memref<8x128xf32, #tpu.memory_space<vmem>>, %arg7: memref<8x16x128xf32, #tpu.memory_space<vmem>>) attributes {dimension_semantics = [#tpu.dimension_semantics<parallel>], iteration_bounds = array<i64: 1>, scalar_prefetch = 0 : i64, scratch_operands = 1 : i64, tpu.core_type = #tpu.core_type<tc>, window_params = [{transform_indices = @transform_0, window_bounds = array<i64: 8, 18, 16>}, {pipeline_mode = #tpu.pipeline_mode<synchronous>, transform_indices = @transform_1, window_bounds = array<i64: 128, 128>}, {pipeline_mode = #tpu.pipeline_mode<synchronous>, transform_indices = @transform_2, window_bounds = array<i64: 1, 128>}, {pipeline_mode = #tpu.pipeline_mode<synchronous>, transform_indices = @transform_3, window_bounds = array<i64: 128, 128>}, {pipeline_mode = #tpu.pipeline_mode<synchronous>, transform_indices = @transform_4, window_bounds = array<i64: 1, 128>}, {transform_indices = @transform_5, window_bounds = array<i64: 8, 128>}]} {
    %c0 = arith.constant 0 : index
    %c0_0 = arith.constant 0 : index
    %c0_1 = arith.constant 0 : index
    %0 = vector.load %arg1[%c0, %c0_0, %c0_1] : memref<8x18x16xbf16, #tpu.memory_space<vmem>>, vector<8x18x16xbf16>
    %1 = arith.extf %0 : vector<8x18x16xbf16> to vector<8x18x16xf32>
    %cst = arith.constant 0.000000e+00 : f32
    %2 = vector.broadcast %cst : f32 to vector<8x16x80xf32>
    %c0_2 = arith.constant 0 : index
    %c0_3 = arith.constant 0 : index
    %c48 = arith.constant 48 : index
    %3 = vector.load %arg7[%c0_2, %c0_3, %c48] : memref<8x16x128xf32, #tpu.memory_space<vmem>>, vector<8x16x80xf32>
    tpu.vector_store %arg7[%c0_2, %c0_3, %c48], %2 {strides = array<i32>} : memref<8x16x128xf32, #tpu.memory_space<vmem>>, vector<8x16x80xf32>,
    %cst_4 = arith.constant 0.000000e+00 : f32
    %4 = vector.broadcast %cst_4 : f32 to vector<8x128xf32>
    %5 = vector.extract_strided_slice %1 {offsets = [0, 0, 0], sizes = [8, 16, 16], strides = [1, 1, 1]} : vector<8x18x16xf32> to vector<8x16x16xf32>
    %c0_5 = arith.constant 0 : index
    %c0_6 = arith.constant 0 : index
    %c0_7 = arith.constant 0 : index
    %6 = vector.load %arg7[%c0_5, %c0_6, %c0_7] : memref<8x16x128xf32, #tpu.memory_space<vmem>>, vector<8x16x16xf32>
    tpu.vector_store %arg7[%c0_5, %c0_6, %c0_7], %5 {strides = array<i32>} : memref<8x16x128xf32, #tpu.memory_space<vmem>>, vector<8x16x16xf32>,
    %7 = vector.extract_strided_slice %1 {offsets = [0, 1, 0], sizes = [8, 16, 16], strides = [1, 1, 1]} : vector<8x18x16xf32> to vector<8x16x16xf32>
    %c0_8 = arith.constant 0 : index
    %c0_9 = arith.constant 0 : index
    %c16 = arith.constant 16 : index
    %8 = vector.load %arg7[%c0_8, %c0_9, %c16] : memref<8x16x128xf32, #tpu.memory_space<vmem>>, vector<8x16x16xf32>
    tpu.vector_store %arg7[%c0_8, %c0_9, %c16], %7 {strides = array<i32>} : memref<8x16x128xf32, #tpu.memory_space<vmem>>, vector<8x16x16xf32>,
    %9 = vector.extract_strided_slice %1 {offsets = [0, 2, 0], sizes = [8, 16, 16], strides = [1, 1, 1]} : vector<8x18x16xf32> to vector<8x16x16xf32>
    %c0_10 = arith.constant 0 : index
    %c0_11 = arith.constant 0 : index
    %c32 = arith.constant 32 : index
    %10 = vector.load %arg7[%c0_10, %c0_11, %c32] : memref<8x16x128xf32, #tpu.memory_space<vmem>>, vector<8x16x16xf32>
    tpu.vector_store %arg7[%c0_10, %c0_11, %c32], %9 {strides = array<i32>} : memref<8x16x128xf32, #tpu.memory_space<vmem>>, vector<8x16x16xf32>,
    %c0_12 = arith.constant 0 : index
    %c0_13 = arith.constant 0 : index
    %c0_14 = arith.constant 0 : index
    %11 = vector.load %arg7[%c0_12, %c0_13, %c0_14] : memref<8x16x128xf32, #tpu.memory_space<vmem>>, vector<8x16x128xf32>
    %12 = vector.shape_cast %11 : vector<8x16x128xf32> to vector<128x128xf32>
    %13 = arith.truncf %12 : vector<128x128xf32> to vector<128x128xbf16>
    %c0_15 = arith.constant 0 : index
    %c0_16 = arith.constant 0 : index
    %14 = vector.load %arg2[%c0_15, %c0_16] : memref<128x128xbf16, #tpu.memory_space<vmem>>, vector<128x128xbf16>
    %cst_17 = arith.constant dense<0.000000e+00> : vector<128x128xf32>
    %15 = tpu.matmul %13, %14, %cst_17 {dimension_numbers = #tpu.dot_dimension_numbers<[1], [0], [0], [1], [0, 0, 1, 1], [], []>} : vector<128x128xbf16>, vector<128x128xbf16>, vector<128x128xf32> -> vector<128x128xf32>
    %16 = vector.shape_cast %15 : vector<128x128xf32> to vector<8x16x128xf32>
    %c0_18 = arith.constant 0 : index
    %c0_19 = arith.constant 0 : index
    %17 = vector.load %arg3[%c0_18, %c0_19] : memref<1x128xf32, #tpu.memory_space<vmem>>, vector<1x128xf32>
    %18 = vector.shape_cast %17 : vector<1x128xf32> to vector<1x1x128xf32>
    %19 = vector.broadcast %18 : vector<1x1x128xf32> to vector<8x16x128xf32>
    %20 = arith.addf %16, %19 : vector<8x16x128xf32>
    %cst_20 = arith.constant 0.000000e+00 : f32
    %21 = vector.broadcast %cst_20 : f32 to vector<8x16x128xf32>
    %22 = arith.maximumf %20, %21 : vector<8x16x128xf32>
    %23 = tpu.iota {dimensions = array<i32: 0>} : vector<16x1xi32>
    %c0_i32 = arith.constant 0 : i32
    %24 = vector.broadcast %c0_i32 : i32 to vector<16x1xi32>
    %25 = arith.addi %24, %23 : vector<16x1xi32>
    %c8_i32 = arith.constant 8 : i32
    %26 = vector.broadcast %c8_i32 : i32 to vector<16x1xi32>
    %27 = arith.cmpi slt, %25, %26 : vector<16x1xi32>
    %cst_21 = arith.constant 0.000000e+00 : f32
    %28 = vector.shape_cast %27 : vector<16x1xi1> to vector<1x16x1xi1>
    %29 = vector.broadcast %28 : vector<1x16x1xi1> to vector<8x16x128xi1>
    %30 = vector.broadcast %cst_21 : f32 to vector<8x16x128xf32>
    %31 = arith.select %29, %22, %30 : vector<8x16x128xi1>, vector<8x16x128xf32>
    %cst_22 = arith.constant dense<0xFF800000> : vector<8x128xf32>
    %32 = vector.multi_reduction <maximumf>, %31, %cst_22 [1] : vector<8x16x128xf32> to vector<8x128xf32>
    %33 = arith.maximumf %4, %32 : vector<8x128xf32>
    %34 = arith.truncf %33 : vector<8x128xf32> to vector<8x128xbf16>
    %c0_23 = arith.constant 0 : index
    %c0_24 = arith.constant 0 : index
    %35 = vector.load %arg4[%c0_23, %c0_24] : memref<128x128xbf16, #tpu.memory_space<vmem>>, vector<128x128xbf16>
    %cst_25 = arith.constant dense<0.000000e+00> : vector<8x128xf32>
    %36 = tpu.matmul %34, %35, %cst_25 {dimension_numbers = #tpu.dot_dimension_numbers<[1], [0], [0], [1], [0, 0, 1, 1], [], []>} : vector<8x128xbf16>, vector<128x128xbf16>, vector<8x128xf32> -> vector<8x128xf32>
    %c0_26 = arith.constant 0 : index
    %c0_27 = arith.constant 0 : index
    %37 = vector.load %arg5[%c0_26, %c0_27] : memref<1x128xf32, #tpu.memory_space<vmem>>, vector<1x128xf32>
    %38 = vector.broadcast %37 : vector<1x128xf32> to vector<8x128xf32>
    %39 = arith.addf %36, %38 : vector<8x128xf32>
    %cst_28 = arith.constant dense<0xFF800000> : vector<8xf32>
    %40 = vector.multi_reduction <maximumf>, %39, %cst_28 [1] : vector<8x128xf32> to vector<8xf32>
    %41 = vector.shape_cast %40 : vector<8xf32> to vector<8x1xf32>
    %42 = vector.broadcast %41 : vector<8x1xf32> to vector<8x128xf32>
    %43 = arith.subf %39, %42 : vector<8x128xf32>
    %44 = math.exp %43 : vector<8x128xf32>
    %cst_29 = arith.constant dense<0.000000e+00> : vector<8xf32>
    %45 = vector.multi_reduction <add>, %44, %cst_29 [1] : vector<8x128xf32> to vector<8xf32>
    %46 = vector.shape_cast %45 : vector<8xf32> to vector<8x1xf32>
    %47 = math.log %46 : vector<8x1xf32>
    %48 = vector.broadcast %47 : vector<8x1xf32> to vector<8x128xf32>
    %49 = arith.subf %43, %48 : vector<8x128xf32>
    %c0_30 = arith.constant 0 : index
    %c0_31 = arith.constant 0 : index
    %50 = vector.load %arg6[%c0_30, %c0_31] : memref<8x128xf32, #tpu.memory_space<vmem>>, vector<8x128xf32>
    tpu.vector_store %arg6[%c0_30, %c0_31], %49 {strides = array<i32>} : memref<8x128xf32, #tpu.memory_space<vmem>>, vector<8x128xf32>,
    return
  }
  func.func @transform_0(%arg0: i32) -> (i32, i32, i32) {
    %c0_i32 = arith.constant 0 : i32
    %c0_i32_0 = arith.constant 0 : i32
    %c0_i32_1 = arith.constant 0 : i32
    return %arg0, %c0_i32, %c0_i32_0 : i32, i32, i32
  }
  func.func @transform_1(%arg0: i32) -> (i32, i32) {
    %c0_i32 = arith.constant 0 : i32
    %c0_i32_0 = arith.constant 0 : i32
    %c0_i32_1 = arith.constant 0 : i32
    return %c0_i32, %c0_i32_0 : i32, i32
  }
  func.func @transform_2(%arg0: i32) -> (i32, i32) {
    %c0_i32 = arith.constant 0 : i32
    %c0_i32_0 = arith.constant 0 : i32
    %c0_i32_1 = arith.constant 0 : i32
    return %c0_i32, %c0_i32_0 : i32, i32
  }
  func.func @transform_3(%arg0: i32) -> (i32, i32) {
    %c0_i32 = arith.constant 0 : i32
    %c0_i32_0 = arith.constant 0 : i32
    %c0_i32_1 = arith.constant 0 : i32
    return %c0_i32, %c0_i32_0 : i32, i32
  }
  func.func @transform_4(%arg0: i32) -> (i32, i32) {
    %c0_i32 = arith.constant 0 : i32
    %c0_i32_0 = arith.constant 0 : i32
    %c0_i32_1 = arith.constant 0 : i32
    return %c0_i32, %c0_i32_0 : i32, i32
  }
  func.func @transform_5(%arg0: i32) -> (i32, i32) {
    %c0_i32 = arith.constant 0 : i32
    %c0_i32_0 = arith.constant 0 : i32
    return %arg0, %c0_i32 : i32, i32
  }
}

</mosaic_0001>

<llo_original>
// kernel: tpu_custom_call.1
$region0: #{tpu_custom_call.1}
  #allocation0 [shape = 'u32[]', space=smem, size = 0x4, offset = 0x4, fixed_abs, tag = 'smem constant byte address 0x4 - core index']
  #allocation1 [shape = 'u32[72,128]{1,0:T(1,128)}', space=vmem, size = 0x9000, scoped, tag = 'internal scratch']
  #allocation2 [shape = 'f32[8,16,128]{2,1,0:T(8,128)}', space=vmem, size = 0x10000, scoped, tag = 'scratch operand']
  %s0 = inlined_call_operand.vmem [shape: bf16[8,18,16], index: 0, kind: input, shape index: {}]
  %s1 = inlined_call_operand.vmem [shape: bf16[128,128], index: 1, kind: input, shape index: {}]
  %s2 = inlined_call_operand.vmem [shape: f32[1,128], index: 2, kind: input, shape index: {}]
  %s3 = inlined_call_operand.vmem [shape: bf16[128,128], index: 3, kind: input, shape index: {}]
  %s4 = inlined_call_operand.vmem [shape: f32[1,128], index: 4, kind: input, shape index: {}]
  %s5 = inlined_call_operand.hbm [shape: f32[8,128], index: 5, kind: output, shape index: {}]
  %s6 = sld [smem:[#allocation0]]
  $region30: #{tpu_custom_call.1} parent=0
    _
  %s8 = ssub.s32 1, %s6
  %s9 = scalar_select 0, %s8, %s6
  $region1: #{tpu_custom_call.1} parent=0
    #allocation3 [shape = 'u8[4096]{0}', space=vmem, size = 0x1000, scoped, tag = 'output window, operand 0, single buffered']
    #allocation4 [shape = 's32[1]{0}', space=sflag, size = 0x4, scoped, tag = 'scoped memory for tpu_custom_call.1']
    %10 = vsyncpa [#allocation4], 0
    // Predicated region
    $region2: #{tpu_custom_call.1} parent=1 // pred_check
      _
    $region3: #{tpu_custom_call.1} parent=1 // pred_check_branch
      %12 = sbr.rel (0) target = $region5
    $region4: #{tpu_custom_call.1} parent=1 // pred_region
      _
    $region5: #{tpu_custom_call.1} parent=1 // pred_fallthru
      _
    // Predicated region
    $region6: #{tpu_custom_call.1} parent=1 // pred_check
      _
    $region7: #{tpu_custom_call.1} parent=1 // pred_check_branch
      %14 = sbr.rel (0) target = $region9
    $region8: #{tpu_custom_call.1} parent=1 // pred_region
      _
    $region9: #{tpu_custom_call.1} parent=1 // pred_fallthru
      _
    // Predicated region
    $region10: #{tpu_custom_call.1} parent=1 // pred_check
      _
    $region11: #{tpu_custom_call.1} parent=1 // pred_check_branch
      %16 = sbr.rel (0) target = $region13
    $region12: #{tpu_custom_call.1} parent=1 // pred_region
      _
    $region13: #{tpu_custom_call.1} parent=1 // pred_fallthru
      _
    // Predicated region
    $region14: #{tpu_custom_call.1} parent=1 // pred_check
      _
    $region15: #{tpu_custom_call.1} parent=1 // pred_check_branch
      %18 = sbr.rel (0) target = $region17
    $region16: #{tpu_custom_call.1} parent=1 // pred_region
      _
    $region17: #{tpu_custom_call.1} parent=1 // pred_fallthru
      _
    // Predicated region
    $region18: #{tpu_custom_call.1} parent=1 // pred_check
      _
    $region19: #{tpu_custom_call.1} parent=1 // pred_check_branch
      %20 = sbr.rel (0) target = $region21
    $region20: #{tpu_custom_call.1} parent=1 // pred_region
      _
    $region21: #{tpu_custom_call.1} parent=1 // pred_fallthru
      _
    %v21 = vld [vmem:[%s0] sm:$0xf]
    %v22 = vld [vmem:[%s0 + $0x4] sm:$0xf]
    %v23 = vld [vmem:[%s0 + $0x8] sm:$0x1]
    %v24 = vld [vmem:[%s0 + $0xc] sm:$0xf]
    %v25 = vld [vmem:[%s0 + $0x10] sm:$0xf]
    %v26 = vld [vmem:[%s0 + $0x14] sm:$0x1]
    %v27 = vld [vmem:[%s0 + $0x18] sm:$0xf]
    %v28 = vld [vmem:[%s0 + $0x1c] sm:$0xf]
    %v29 = vld [vmem:[%s0 + $0x20] sm:$0x1]
    %v30 = vld [vmem:[%s0 + $0x24] sm:$0xf]
    %v31 = vld [vmem:[%s0 + $0x28] sm:$0xf]
    %v32 = vld [vmem:[%s0 + $0x2c] sm:$0x1]
    %v33 = vld [vmem:[%s0 + $0x30] sm:$0xf]
    %v34 = vld [vmem:[%s0 + $0x34] sm:$0xf]
    %v35 = vld [vmem:[%s0 + $0x38] sm:$0x1]
    %v36 = vld [vmem:[%s0 + $0x3c] sm:$0xf]
    %v37 = vld [vmem:[%s0 + $0x40] sm:$0xf]
    %v38 = vld [vmem:[%s0 + $0x44] sm:$0x1]
    %v39 = vld [vmem:[%s0 + $0x48] sm:$0xf]
    %v40 = vld [vmem:[%s0 + $0x4c] sm:$0xf]
    %v41 = vld [vmem:[%s0 + $0x50] sm:$0x1]
    %v42 = vld [vmem:[%s0 + $0x54] sm:$0xf]
    %v43 = vld [vmem:[%s0 + $0x58] sm:$0xf]
    %v44 = vld [vmem:[%s0 + $0x5c] sm:$0x1]
    %v45 = vunpack.c.l.bf16 %v21
    %v46 = vunpack.c.l.bf16 %v22
    %v47 = vunpack.c.l.bf16 %v23
    %v48 = vunpack.c.l.bf16 %v24
    %v49 = vunpack.c.l.bf16 %v25
    %v50 = vunpack.c.l.bf16 %v26
    %v51 = vunpack.c.l.bf16 %v27
    %v52 = vunpack.c.l.bf16 %v28
    %v53 = vunpack.c.l.bf16 %v29
    %v54 = vunpack.c.l.bf16 %v30
    %v55 = vunpack.c.l.bf16 %v31
    %v56 = vunpack.c.l.bf16 %v32
    %v57 = vunpack.c.l.bf16 %v33
    %v58 = vunpack.c.l.bf16 %v34
    %v59 = vunpack.c.l.bf16 %v35
    %v60 = vunpack.c.l.bf16 %v36
    %v61 = vunpack.c.l.bf16 %v37
    %v62 = vunpack.c.l.bf16 %v38
    %v63 = vunpack.c.l.bf16 %v39
    %v64 = vunpack.c.l.bf16 %v40
    %v65 = vunpack.c.l.bf16 %v41
    %v66 = vunpack.c.l.bf16 %v42
    %v67 = vunpack.c.l.bf16 %v43
    %v68 = vunpack.c.l.bf16 %v44
    %vm69 = vcmask 1047936
    %70 = vst.msk [vmem:[#allocation2] sm:$0xff] %vm69, 0.0
    %71 = vst.msk [vmem:[#allocation2 + $0x8] sm:$0xff] %vm69, 0.0
    %72 = vst.msk [vmem:[#allocation2 + $0x10] sm:$0xff] %vm69, 0.0
    %73 = vst.msk [vmem:[#allocation2 + $0x18] sm:$0xff] %vm69, 0.0
    %74 = vst.msk [vmem:[#allocation2 + $0x20] sm:$0xff] %vm69, 0.0
    %75 = vst.msk [vmem:[#allocation2 + $0x28] sm:$0xff] %vm69, 0.0
    %76 = vst.msk [vmem:[#allocation2 + $0x30] sm:$0xff] %vm69, 0.0
    %77 = vst.msk [vmem:[#allocation2 + $0x38] sm:$0xff] %vm69, 0.0
    %78 = vst.msk [vmem:[#allocation2 + $0x40] sm:$0xff] %vm69, 0.0
    %79 = vst.msk [vmem:[#allocation2 + $0x48] sm:$0xff] %vm69, 0.0
    %80 = vst.msk [vmem:[#allocation2 + $0x50] sm:$0xff] %vm69, 0.0
    %81 = vst.msk [vmem:[#allocation2 + $0x58] sm:$0xff] %vm69, 0.0
    %82 = vst.msk [vmem:[#allocation2 + $0x60] sm:$0xff] %vm69, 0.0
    %83 = vst.msk [vmem:[#allocation2 + $0x68] sm:$0xff] %vm69, 0.0
    %84 = vst.msk [vmem:[#allocation2 + $0x70] sm:$0xff] %vm69, 0.0
    %85 = vst.msk [vmem:[#allocation2 + $0x78] sm:$0xff] %vm69, 0.0
    %vm86 = vcmask 130048
    %87 = vst.msk [vmem:[#allocation2] sm:$0xff] %vm86, %v45
    %88 = vst.msk [vmem:[#allocation2 + $0x8] sm:$0xff] %vm86, %v46
    %89 = vst.msk [vmem:[#allocation2 + $0x10] sm:$0xff] %vm86, %v48
    %90 = vst.msk [vmem:[#allocation2 + $0x18] sm:$0xff] %vm86, %v49
    %91 = vst.msk [vmem:[#allocation2 + $0x20] sm:$0xff] %vm86, %v51
    %92 = vst.msk [vmem:[#allocation2 + $0x28] sm:$0xff] %vm86, %v52
    %93 = vst.msk [vmem:[#allocation2 + $0x30] sm:$0xff] %vm86, %v54
    %94 = vst.msk [vmem:[#allocation2 + $0x38] sm:$0xff] %vm86, %v55
    %95 = vst.msk [vmem:[#allocation2 + $0x40] sm:$0xff] %vm86, %v57
    %96 = vst.msk [vmem:[#allocation2 + $0x48] sm:$0xff] %vm86, %v58
    %97 = vst.msk [vmem:[#allocation2 + $0x50] sm:$0xff] %vm86, %v60
    %98 = vst.msk [vmem:[#allocation2 + $0x58] sm:$0xff] %vm86, %v61
    %99 = vst.msk [vmem:[#allocation2 + $0x60] sm:$0xff] %vm86, %v63
    %100 = vst.msk [vmem:[#allocation2 + $0x68] sm:$0xff] %vm86, %v64
    %101 = vst.msk [vmem:[#allocation2 + $0x70] sm:$0xff] %vm86, %v66
    %102 = vst.msk [vmem:[#allocation2 + $0x78] sm:$0xff] %vm86, %v67
    %127 = vrot.lane.b32.xlu0 %v45, 16
    %v128 = vpop.permute.xlu0 %127
    %129 = vrot.lane.b32.xlu0 %v46, 16
    %v130 = vpop.permute.xlu0 %129
    %131 = vrot.lane.b32.xlu0 %v47, 16
    %v132 = vpop.permute.xlu0 %131
    %133 = vrot.lane.b32.xlu0 %v48, 16
    %v134 = vpop.permute.xlu0 %133
    %135 = vrot.lane.b32.xlu0 %v49, 16
    %v136 = vpop.permute.xlu0 %135
    %137 = vrot.lane.b32.xlu0 %v50, 16
    %v138 = vpop.permute.xlu0 %137
    %139 = vrot.lane.b32.xlu0 %v51, 16
    %v140 = vpop.permute.xlu0 %139
    %141 = vrot.lane.b32.xlu0 %v52, 16
    %v142 = vpop.permute.xlu0 %141
    %143 = vrot.lane.b32.xlu0 %v53, 16
    %v144 = vpop.permute.xlu0 %143
    %145 = vrot.lane.b32.xlu0 %v54, 16
    %v146 = vpop.permute.xlu0 %145
    %147 = vrot.lane.b32.xlu0 %v55, 16
    %v148 = vpop.permute.xlu0 %147
    %149 = vrot.lane.b32.xlu0 %v56, 16
    %v150 = vpop.permute.xlu0 %149
    %151 = vrot.lane.b32.xlu0 %v57, 16
    %v152 = vpop.permute.xlu0 %151
    %153 = vrot.lane.b32.xlu0 %v58, 16
    %v154 = vpop.permute.xlu0 %153
    %155 = vrot.lane.b32.xlu0 %v59, 16
    %v156 = vpop.permute.xlu0 %155
    %157 = vrot.lane.b32.xlu0 %v60, 16
    %v158 = vpop.permute.xlu0 %157
    %159 = vrot.lane.b32.xlu0 %v61, 16
    %v160 = vpop.permute.xlu0 %159
    %161 = vrot.lane.b32.xlu0 %v62, 16
    %v162 = vpop.permute.xlu0 %161
    %163 = vrot.lane.b32.xlu0 %v63, 16
    %v164 = vpop.permute.xlu0 %163
    %165 = vrot.lane.b32.xlu0 %v64, 16
    %v166 = vpop.permute.xlu0 %165
    %167 = vrot.lane.b32.xlu0 %v65, 16
    %v168 = vpop.permute.xlu0 %167
    %169 = vrot.lane.b32.xlu0 %v66, 16
    %v170 = vpop.permute.xlu0 %169
    %171 = vrot.lane.b32.xlu0 %v67, 16
    %v172 = vpop.permute.xlu0 %171
    %173 = vrot.lane.b32.xlu0 %v68, 16
    %v174 = vpop.permute.xlu0 %173
    %vm199 = vcmask 261249
    %200 = vst.msk [vmem:[#allocation2 - $0x1] sm:$0xfe] %vm199, %v128
    %vm201 = vcmask 261248
    %202 = vst.msk [vmem:[#allocation2 + $0x7] sm:$0xff] %vm201, %v130
    %vm203 = vcmask 254080
    %204 = vst.msk [vmem:[#allocation2 + $0xf] sm:$0x1] %vm203, %v132
    %205 = vst.msk [vmem:[#allocation2 + $0xf] sm:$0xfe] %vm199, %v134
    %206 = vst.msk [vmem:[#allocation2 + $0x17] sm:$0xff] %vm201, %v136
    %207 = vst.msk [vmem:[#allocation2 + $0x1f] sm:$0x1] %vm203, %v138
    %208 = vst.msk [vmem:[#allocation2 + $0x1f] sm:$0xfe] %vm199, %v140
    %209 = vst.msk [vmem:[#allocation2 + $0x27] sm:$0xff] %vm201, %v142
    %210 = vst.msk [vmem:[#allocation2 + $0x2f] sm:$0x1] %vm203, %v144
    %211 = vst.msk [vmem:[#allocation2 + $0x2f] sm:$0xfe] %vm199, %v146
    %212 = vst.msk [vmem:[#allocation2 + $0x37] sm:$0xff] %vm201, %v148
    %213 = vst.msk [vmem:[#allocation2 + $0x3f] sm:$0x1] %vm203, %v150
    %214 = vst.msk [vmem:[#allocation2 + $0x3f] sm:$0xfe] %vm199, %v152
    %215 = vst.msk [vmem:[#allocation2 + $0x47] sm:$0xff] %vm201, %v154
    %216 = vst.msk [vmem:[#allocation2 + $0x4f] sm:$0x1] %vm203, %v156
    %217 = vst.msk [vmem:[#allocation2 + $0x4f] sm:$0xfe] %vm199, %v158
    %218 = vst.msk [vmem:[#allocation2 + $0x57] sm:$0xff] %vm201, %v160
    %219 = vst.msk [vmem:[#allocation2 + $0x5f] sm:$0x1] %vm203, %v162
    %220 = vst.msk [vmem:[#allocation2 + $0x5f] sm:$0xfe] %vm199, %v164
    %221 = vst.msk [vmem:[#allocation2 + $0x67] sm:$0xff] %vm201, %v166
    %222 = vst.msk [vmem:[#allocation2 + $0x6f] sm:$0x1] %vm203, %v168
    %223 = vst.msk [vmem:[#allocation2 + $0x6f] sm:$0xfe] %vm199, %v170
    %224 = vst.msk [vmem:[#allocation2 + $0x77] sm:$0xff] %vm201, %v172
    %225 = vst.msk [vmem:[#allocation2 + $0x7f] sm:$0x1] %vm203, %v174
    %226 = vrot.lane.b32.xlu0 %v45, 32
    %v227 = vpop.permute.xlu0 %226
    %228 = vrot.lane.b32.xlu0 %v46, 32
    %v229 = vpop.permute.xlu0 %228
    %230 = vrot.lane.b32.xlu0 %v47, 32
    %v231 = vpop.permute.xlu0 %230
    %232 = vrot.lane.b32.xlu0 %v48, 32
    %v233 = vpop.permute.xlu0 %232
    %234 = vrot.lane.b32.xlu0 %v49, 32
    %v235 = vpop.permute.xlu0 %234
    %236 = vrot.lane.b32.xlu0 %v50, 32
    %v237 = vpop.permute.xlu0 %236
    %238 = vrot.lane.b32.xlu0 %v51, 32
    %v239 = vpop.permute.xlu0 %238
    %240 = vrot.lane.b32.xlu0 %v52, 32
    %v241 = vpop.permute.xlu0 %240
    %242 = vrot.lane.b32.xlu0 %v53, 32
    %v243 = vpop.permute.xlu0 %242
    %244 = vrot.lane.b32.xlu0 %v54, 32
    %v245 = vpop.permute.xlu0 %244
    %246 = vrot.lane.b32.xlu0 %v55, 32
    %v247 = vpop.permute.xlu0 %246
    %248 = vrot.lane.b32.xlu0 %v56, 32
    %v249 = vpop.permute.xlu0 %248
    %250 = vrot.lane.b32.xlu0 %v57, 32
    %v251 = vpop.permute.xlu0 %250
    %252 = vrot.lane.b32.xlu0 %v58, 32
    %v253 = vpop.permute.xlu0 %252
    %254 = vrot.lane.b32.xlu0 %v59, 32
    %v255 = vpop.permute.xlu0 %254
    %256 = vrot.lane.b32.xlu0 %v60, 32
    %v257 = vpop.permute.xlu0 %256
    %258 = vrot.lane.b32.xlu0 %v61, 32
    %v259 = vpop.permute.xlu0 %258
    %260 = vrot.lane.b32.xlu0 %v62, 32
    %v261 = vpop.permute.xlu0 %260
    %262 = vrot.lane.b32.xlu0 %v63, 32
    %v263 = vpop.permute.xlu0 %262
    %264 = vrot.lane.b32.xlu0 %v64, 32
    %v265 = vpop.permute.xlu0 %264
    %266 = vrot.lane.b32.xlu0 %v65, 32
    %v267 = vpop.permute.xlu0 %266
    %268 = vrot.lane.b32.xlu0 %v66, 32
    %v269 = vpop.permute.xlu0 %268
    %270 = vrot.lane.b32.xlu0 %v67, 32
    %v271 = vpop.permute.xlu0 %270
    %272 = vrot.lane.b32.xlu0 %v68, 32
    %v273 = vpop.permute.xlu0 %272
    %vm298 = vcmask 392450
    %299 = vst.msk [vmem:[#allocation2 - $0x2] sm:$0xfc] %vm298, %v227
    %vm300 = vcmask 392448
    %301 = vst.msk [vmem:[#allocation2 + $0x6] sm:$0xff] %vm300, %v229
    %vm302 = vcmask 386304
    %303 = vst.msk [vmem:[#allocation2 + $0xe] sm:$0x3] %vm302, %v231
    %304 = vst.msk [vmem:[#allocation2 + $0xe] sm:$0xfc] %vm298, %v233
    %305 = vst.msk [vmem:[#allocation2 + $0x16] sm:$0xff] %vm300, %v235
    %306 = vst.msk [vmem:[#allocation2 + $0x1e] sm:$0x3] %vm302, %v237
    %307 = vst.msk [vmem:[#allocation2 + $0x1e] sm:$0xfc] %vm298, %v239
    %308 = vst.msk [vmem:[#allocation2 + $0x26] sm:$0xff] %vm300, %v241
    %309 = vst.msk [vmem:[#allocation2 + $0x2e] sm:$0x3] %vm302, %v243
    %310 = vst.msk [vmem:[#allocation2 + $0x2e] sm:$0xfc] %vm298, %v245
    %311 = vst.msk [vmem:[#allocation2 + $0x36] sm:$0xff] %vm300, %v247
    %312 = vst.msk [vmem:[#allocation2 + $0x3e] sm:$0x3] %vm302, %v249
    %313 = vst.msk [vmem:[#allocation2 + $0x3e] sm:$0xfc] %vm298, %v251
    %314 = vst.msk [vmem:[#allocation2 + $0x46] sm:$0xff] %vm300, %v253
    %315 = vst.msk [vmem:[#allocation2 + $0x4e] sm:$0x3] %vm302, %v255
    %316 = vst.msk [vmem:[#allocation2 + $0x4e] sm:$0xfc] %vm298, %v257
    %317 = vst.msk [vmem:[#allocation2 + $0x56] sm:$0xff] %vm300, %v259
    %318 = vst.msk [vmem:[#allocation2 + $0x5e] sm:$0x3] %vm302, %v261
    %319 = vst.msk [vmem:[#allocation2 + $0x5e] sm:$0xfc] %vm298, %v263
    %320 = vst.msk [vmem:[#allocation2 + $0x66] sm:$0xff] %vm300, %v265
    %321 = vst.msk [vmem:[#allocation2 + $0x6e] sm:$0x3] %vm302, %v267
    %322 = vst.msk [vmem:[#allocation2 + $0x6e] sm:$0xfc] %vm298, %v269
    %323 = vst.msk [vmem:[#allocation2 + $0x76] sm:$0xff] %vm300, %v271
    %324 = vst.msk [vmem:[#allocation2 + $0x7e] sm:$0x3] %vm302, %v273
    %v325 = vld [vmem:[#allocation2] sm:$0xff]
    %v326 = vld [vmem:[#allocation2 + $0x8] sm:$0xff]
    %v327 = vld [vmem:[#allocation2 + $0x10] sm:$0xff]
    %v328 = vld [vmem:[#allocation2 + $0x18] sm:$0xff]
    %v329 = vld [vmem:[#allocation2 + $0x20] sm:$0xff]
    %v330 = vld [vmem:[#allocation2 + $0x28] sm:$0xff]
    %v331 = vld [vmem:[#allocation2 + $0x30] sm:$0xff]
    %v332 = vld [vmem:[#allocation2 + $0x38] sm:$0xff]
    %v333 = vld [vmem:[#allocation2 + $0x40] sm:$0xff]
    %v334 = vld [vmem:[#allocation2 + $0x48] sm:$0xff]
    %v335 = vld [vmem:[#allocation2 + $0x50] sm:$0xff]
    %v336 = vld [vmem:[#allocation2 + $0x58] sm:$0xff]
    %v337 = vld [vmem:[#allocation2 + $0x60] sm:$0xff]
    %v338 = vld [vmem:[#allocation2 + $0x68] sm:$0xff]
    %v339 = vld [vmem:[#allocation2 + $0x70] sm:$0xff]
    %v340 = vld [vmem:[#allocation2 + $0x78] sm:$0xff]
    %v341 = vpack.c.bf16 %v326, %v325
    %v342 = vpack.c.bf16 %v328, %v327
    %v343 = vpack.c.bf16 %v330, %v329
    %v344 = vpack.c.bf16 %v332, %v331
    %v345 = vpack.c.bf16 %v334, %v333
    %v346 = vpack.c.bf16 %v336, %v335
    %v347 = vpack.c.bf16 %v338, %v337
    %v348 = vpack.c.bf16 %v340, %v339
    %v349 = vld [vmem:[%s1] sm:$0xf]
    %v350 = vld [vmem:[%s1 + $0x4] sm:$0xf]
    %v351 = vld [vmem:[%s1 + $0x8] sm:$0xf]
    %v352 = vld [vmem:[%s1 + $0xc] sm:$0xf]
    %v353 = vld [vmem:[%s1 + $0x10] sm:$0xf]
    %v354 = vld [vmem:[%s1 + $0x14] sm:$0xf]
    %v355 = vld [vmem:[%s1 + $0x18] sm:$0xf]
    %v356 = vld [vmem:[%s1 + $0x1c] sm:$0xf]
    %v357 = vld [vmem:[%s1 + $0x20] sm:$0xf]
    %v358 = vld [vmem:[%s1 + $0x24] sm:$0xf]
    %v359 = vld [vmem:[%s1 + $0x28] sm:$0xf]
    %v360 = vld [vmem:[%s1 + $0x2c] sm:$0xf]
    %v361 = vld [vmem:[%s1 + $0x30] sm:$0xf]
    %v362 = vld [vmem:[%s1 + $0x34] sm:$0xf]
    %v363 = vld [vmem:[%s1 + $0x38] sm:$0xf]
    %v364 = vld [vmem:[%s1 + $0x3c] sm:$0xf]
    %v381 = vunpack.c.l.b16 %v349
    %v382 = vunpack.c.l.b16 %v350
    %v383 = vunpack.c.l.b16 %v351
    %v384 = vunpack.c.l.b16 %v352
    %v385 = vunpack.c.l.b16 %v353
    %v386 = vunpack.c.l.b16 %v354
    %v387 = vunpack.c.l.b16 %v355
    %v388 = vunpack.c.l.b16 %v356
    %v389 = vunpack.c.l.b16 %v357
    %v390 = vunpack.c.l.b16 %v358
    %v391 = vunpack.c.l.b16 %v359
    %v392 = vunpack.c.l.b16 %v360
    %v393 = vunpack.c.l.b16 %v361
    %v394 = vunpack.c.l.b16 %v362
    %v395 = vunpack.c.l.b16 %v363
    %v396 = vunpack.c.l.b16 %v364
    %v397 = vpack.c.b16 %v382, %v381
    %v398 = vpack.c.b16 %v384, %v383
    %v399 = vpack.c.b16 %v386, %v385
    %v400 = vpack.c.b16 %v388, %v387
    %v401 = vpack.c.b16 %v390, %v389
    %v402 = vpack.c.b16 %v392, %v391
    %v403 = vpack.c.b16 %v394, %v393
    %v404 = vpack.c.b16 %v396, %v395
    %413 = vmatpush.bf16.msra.mxu0 %v404
    %414 = vmatpush.bf16.msra.mxu0 %v403
    %415 = vmatpush.bf16.msra.mxu0 %v402
    %416 = vmatpush.bf16.msra.mxu0 %v401
    %417 = vmatpush.bf16.msra.mxu0 %v400
    %418 = vmatpush.bf16.msra.mxu0 %v399
    %419 = vmatpush.bf16.msra.mxu0 %v398
    %420 = vmatpush.bf16.msra.mxu0 %v397
    %421 = vmatmul.bf16.gmra.mxu0 %v341
    %v422 = vpop.f32.mrf.mxu0
    %v423 = vadd.f32 0.0, %v422
    %v424 = vpop.f32.mrf.mxu0
    %v425 = vadd.f32 0.0, %v424
    %426 = vmatmul.bf16.gmra.mxu0 %v342
    %v427 = vpop.f32.mrf.mxu0
    %v428 = vadd.f32 0.0, %v427
    %v429 = vpop.f32.mrf.mxu0
    %v430 = vadd.f32 0.0, %v429
    %431 = vmatmul.bf16.gmra.mxu0 %v343
    %v432 = vpop.f32.mrf.mxu0
    %v433 = vadd.f32 0.0, %v432
    %v434 = vpop.f32.mrf.mxu0
    %v435 = vadd.f32 0.0, %v434
    %436 = vmatmul.bf16.gmra.mxu0 %v344
    %v437 = vpop.f32.mrf.mxu0
    %v438 = vadd.f32 0.0, %v437
    %v439 = vpop.f32.mrf.mxu0
    %v440 = vadd.f32 0.0, %v439
    %441 = vmatmul.bf16.gmra.mxu0 %v345
    %v442 = vpop.f32.mrf.mxu0
    %v443 = vadd.f32 0.0, %v442
    %v444 = vpop.f32.mrf.mxu0
    %v445 = vadd.f32 0.0, %v444
    %446 = vmatmul.bf16.gmra.mxu0 %v346
    %v447 = vpop.f32.mrf.mxu0
    %v448 = vadd.f32 0.0, %v447
    %v449 = vpop.f32.mrf.mxu0
    %v450 = vadd.f32 0.0, %v449
    %451 = vmatmul.bf16.gmra.mxu0 %v347
    %v452 = vpop.f32.mrf.mxu0
    %v453 = vadd.f32 0.0, %v452
    %v454 = vpop.f32.mrf.mxu0
    %v455 = vadd.f32 0.0, %v454
    %456 = vmatmul.bf16.gmra.mxu0 %v348
    %v457 = vpop.f32.mrf.mxu0
    %v458 = vadd.f32 0.0, %v457
    %v459 = vpop.f32.mrf.mxu0
    %v460 = vadd.f32 0.0, %v459
    %461 = vdwg.mxu0
    %v462 = vld [vmem:[%s2] sm:$0x1]
    %v464 = vperm.slane %v462, 0
    %v466 = vadd.f32 %v423, %v464
    %v467 = vadd.f32 %v425, %v464
    %v468 = vadd.f32 %v428, %v464
    %v469 = vadd.f32 %v430, %v464
    %v470 = vadd.f32 %v433, %v464
    %v471 = vadd.f32 %v435, %v464
    %v472 = vadd.f32 %v438, %v464
    %v473 = vadd.f32 %v440, %v464
    %v474 = vadd.f32 %v443, %v464
    %v475 = vadd.f32 %v445, %v464
    %v476 = vadd.f32 %v448, %v464
    %v477 = vadd.f32 %v450, %v464
    %v478 = vadd.f32 %v453, %v464
    %v479 = vadd.f32 %v455, %v464
    %v480 = vadd.f32 %v458, %v464
    %v481 = vadd.f32 %v460, %v464
    %v482 = vmax.f32 %v466, 0.0
    %v483 = vmax.f32 %v467, 0.0
    %v484 = vmax.f32 %v468, 0.0
    %v485 = vmax.f32 %v469, 0.0
    %v486 = vmax.f32 %v470, 0.0
    %v487 = vmax.f32 %v471, 0.0
    %v488 = vmax.f32 %v472, 0.0
    %v489 = vmax.f32 %v473, 0.0
    %v490 = vmax.f32 %v474, 0.0
    %v491 = vmax.f32 %v475, 0.0
    %v492 = vmax.f32 %v476, 0.0
    %v493 = vmax.f32 %v477, 0.0
    %v494 = vmax.f32 %v478, 0.0
    %v495 = vmax.f32 %v479, 0.0
    %v496 = vmax.f32 %v480, 0.0
    %v497 = vmax.f32 %v481, 0.0
    %v498 = vlaneseq
    %v499 = vshrl.u32 %v498, 7
    %v500 = vadd.s32 %v499, 8
    %vm501 = vcmp.lt.s32.totalorder %v499, 8
    %vm502 = vcmp.lt.s32.totalorder %v500, 8
    %v503 = vsel %vm501, 1, 0
    %v504 = vsel %vm502, 1, 0
    %vm505 = vcmp.eq.s32.totalorder %v503, 1
    %vm506 = vcmp.eq.s32.totalorder %v504, 1
    %v507 = vsel %vm505, %v482, 0.0
    %v508 = vsel %vm506, %v483, 0.0
    %v509 = vsel %vm505, %v484, 0.0
    %v510 = vsel %vm506, %v485, 0.0
    %v511 = vsel %vm505, %v486, 0.0
    %v512 = vsel %vm506, %v487, 0.0
    %v513 = vsel %vm505, %v488, 0.0
    %v514 = vsel %vm506, %v489, 0.0
    %v515 = vsel %vm505, %v490, 0.0
    %v516 = vsel %vm506, %v491, 0.0
    %v517 = vsel %vm505, %v492, 0.0
    %v518 = vsel %vm506, %v493, 0.0
    %v519 = vsel %vm505, %v494, 0.0
    %v520 = vsel %vm506, %v495, 0.0
    %v521 = vsel %vm505, %v496, 0.0
    %v522 = vsel %vm506, %v497, 0.0
    %v523 = vmax.f32 %v507, %v508
    %v524 = vrot.slane %v523, 4
    %v525 = vmax.f32 %v523, %v524
    %v526 = vrot.slane %v525, 2
    %v527 = vmax.f32 %v525, %v526
    %v528 = vrot.slane %v527, 1
    %v529 = vmax.f32 %v527, %v528
    %v530 = vmax.f32 %v509, %v510
    %v531 = vrot.slane %v530, 4
    %v532 = vmax.f32 %v530, %v531
    %v533 = vrot.slane %v532, 2
    %v534 = vmax.f32 %v532, %v533
    %v535 = vrot.slane %v534, 1
    %v536 = vmax.f32 %v534, %v535
    %v537 = vmax.f32 %v511, %v512
    %v538 = vrot.slane %v537, 4
    %v539 = vmax.f32 %v537, %v538
    %v540 = vrot.slane %v539, 2
    %v541 = vmax.f32 %v539, %v540
    %v542 = vrot.slane %v541, 1
    %v543 = vmax.f32 %v541, %v542
    %v544 = vmax.f32 %v513, %v514
    %v545 = vrot.slane %v544, 4
    %v546 = vmax.f32 %v544, %v545
    %v547 = vrot.slane %v546, 2
    %v548 = vmax.f32 %v546, %v547
    %v549 = vrot.slane %v548, 1
    %v550 = vmax.f32 %v548, %v549
    %v551 = vmax.f32 %v515, %v516
    %v552 = vrot.slane %v551, 4
    %v553 = vmax.f32 %v551, %v552
    %v554 = vrot.slane %v553, 2
    %v555 = vmax.f32 %v553, %v554
    %v556 = vrot.slane %v555, 1
    %v557 = vmax.f32 %v555, %v556
    %v558 = vmax.f32 %v517, %v518
    %v559 = vrot.slane %v558, 4
    %v560 = vmax.f32 %v558, %v559
    %v561 = vrot.slane %v560, 2
    %v562 = vmax.f32 %v560, %v561
    %v563 = vrot.slane %v562, 1
    %v564 = vmax.f32 %v562, %v563
    %v565 = vmax.f32 %v519, %v520
    %v566 = vrot.slane %v565, 4
    %v567 = vmax.f32 %v565, %v566
    %v568 = vrot.slane %v567, 2
    %v569 = vmax.f32 %v567, %v568
    %v570 = vrot.slane %v569, 1
    %v571 = vmax.f32 %v569, %v570
    %v572 = vmax.f32 %v521, %v522
    %v573 = vrot.slane %v572, 4
    %v574 = vmax.f32 %v572, %v573
    %v575 = vrot.slane %v574, 2
    %v576 = vmax.f32 %v574, %v575
    %v577 = vrot.slane %v576, 1
    %v578 = vmax.f32 %v576, %v577
    %v579 = vmax.f32 %v529, 0.0
    %v580 = vmax.f32 %v536, 0.0
    %v581 = vmax.f32 %v543, 0.0
    %v582 = vmax.f32 %v550, 0.0
    %v583 = vmax.f32 %v557, 0.0
    %v584 = vmax.f32 %v564, 0.0
    %v585 = vmax.f32 %v571, 0.0
    %v586 = vmax.f32 %v578, 0.0
    %v587 = vpack.c.bf16 %v579, %v579
    %v588 = vpack.c.bf16 %v580, %v580
    %v589 = vpack.c.bf16 %v581, %v581
    %v590 = vpack.c.bf16 %v582, %v582
    %v591 = vpack.c.bf16 %v583, %v583
    %v592 = vpack.c.bf16 %v584, %v584
    %v593 = vpack.c.bf16 %v585, %v585
    %v594 = vpack.c.bf16 %v586, %v586
    %v595 = vld [vmem:[%s3] sm:$0xf]
    %v596 = vld [vmem:[%s3 + $0x4] sm:$0xf]
    %v597 = vld [vmem:[%s3 + $0x8] sm:$0xf]
    %v598 = vld [vmem:[%s3 + $0xc] sm:$0xf]
    %v599 = vld [vmem:[%s3 + $0x10] sm:$0xf]
    %v600 = vld [vmem:[%s3 + $0x14] sm:$0xf]
    %v601 = vld [vmem:[%s3 + $0x18] sm:$0xf]
    %v602 = vld [vmem:[%s3 + $0x1c] sm:$0xf]
    %v603 = vld [vmem:[%s3 + $0x20] sm:$0xf]
    %v604 = vld [vmem:[%s3 + $0x24] sm:$0xf]
    %v605 = vld [vmem:[%s3 + $0x28] sm:$0xf]
    %v606 = vld [vmem:[%s3 + $0x2c] sm:$0xf]
    %v607 = vld [vmem:[%s3 + $0x30] sm:$0xf]
    %v608 = vld [vmem:[%s3 + $0x34] sm:$0xf]
    %v609 = vld [vmem:[%s3 + $0x38] sm:$0xf]
    %v610 = vld [vmem:[%s3 + $0x3c] sm:$0xf]
    %v611 = vld [vmem:[%s4] sm:$0x1]
    %v613 = vperm.slane %v611, 0
    %v623 = vunpack.c.l.b16 %v587
    %v624 = vunpack.c.l.b16 %v588
    %v625 = vunpack.c.l.b16 %v589
    %v626 = vunpack.c.l.b16 %v590
    %v627 = vunpack.c.l.b16 %v591
    %v628 = vunpack.c.l.b16 %v592
    %v629 = vunpack.c.l.b16 %v593
    %v630 = vunpack.c.l.b16 %v594
    %vm631 = vcmask 1041409
    %v632 = vsel %vm631, %v624, %v623
    %vm633 = vcmask 1042434
    %v634 = vsel %vm633, %v625, %v632
    %vm635 = vcmask 1043459
    %v636 = vsel %vm635, %v626, %v634
    %vm637 = vcmask 1044484
    %v638 = vsel %vm637, %v627, %v636
    %vm639 = vcmask 1045509
    %v640 = vsel %vm639, %v628, %v638
    %vm641 = vcmask 1046534
    %v642 = vsel %vm641, %v629, %v640
    %vm643 = vcmask 1047559
    %v644 = vsel %vm643, %v630, %v642
    %v645 = vpack.c.b16 %v644, %v644
    %v663 = vunpack.c.l.b16 %v595
    %v664 = vunpack.c.l.b16 %v596
    %v665 = vunpack.c.l.b16 %v597
    %v666 = vunpack.c.l.b16 %v598
    %v667 = vunpack.c.l.b16 %v599
    %v668 = vunpack.c.l.b16 %v600
    %v669 = vunpack.c.l.b16 %v601
    %v670 = vunpack.c.l.b16 %v602
    %v671 = vunpack.c.l.b16 %v603
    %v672 = vunpack.c.l.b16 %v604
    %v673 = vunpack.c.l.b16 %v605
    %v674 = vunpack.c.l.b16 %v606
    %v675 = vunpack.c.l.b16 %v607
    %v676 = vunpack.c.l.b16 %v608
    %v677 = vunpack.c.l.b16 %v609
    %v678 = vunpack.c.l.b16 %v610
    %v679 = vpack.c.b16 %v664, %v663
    %v680 = vpack.c.b16 %v666, %v665
    %v681 = vpack.c.b16 %v668, %v667
    %v682 = vpack.c.b16 %v670, %v669
    %v683 = vpack.c.b16 %v672, %v671
    %v684 = vpack.c.b16 %v674, %v673
    %v685 = vpack.c.b16 %v676, %v675
    %v686 = vpack.c.b16 %v678, %v677
    %695 = vmatpush.bf16.msra.mxu0 %v686
    %696 = vmatpush.bf16.msra.mxu0 %v685
    %697 = vmatpush.bf16.msra.mxu0 %v684
    %698 = vmatpush.bf16.msra.mxu0 %v683
    %699 = vmatpush.bf16.msra.mxu0 %v682
    %700 = vmatpush.bf16.msra.mxu0 %v681
    %701 = vmatpush.bf16.msra.mxu0 %v680
    %702 = vmatpush.bf16.msra.mxu0 %v679
    %703 = vmatmul.bf16.gmra.mxu0 %v645
    %v704 = vpop.f32.mrf.mxu0
    %v705 = vadd.f32 %v613, %v704
    %v706 = vpop.f32.mrf.mxu0
    %707 = vdwg.mxu0
    %708 = vmax.xlane.f32.xlu0 %v705
    %v709 = vpop.xlane.xlu0 %708
    %v710 = vsub.f32 %v705, %v709
    %v711 = vmul.f32 %v710, 1.442695
    %v712 = vpow.pop %v711
    %713 = vadd.xlane.f32.xlu0 %v712
    %v714 = vpop.xlane.xlu0 %713
    %v715 = vlog2.pop %v714
    %v716 = vmul.f32 %v715, 0.6931472
    %v717 = vsub.f32 %v710, %v716
    %718 = vst [vmem:[#allocation3] sm:$0xff] %v717
    // Predicated region
    $region22: #{tpu_custom_call.1} parent=1 // pred_check
      _
    $region23: #{tpu_custom_call.1} parent=1 // pred_check_branch
      %720 = sbr.rel (0) target = $region25
    $region24: #{tpu_custom_call.1} parent=1 // pred_region
      %722 = vsyncadd [#allocation4], 0
      %s724 = sshll.u32 [#allocation3], 4
      %s725 = int_to_ptr.vmem [resolvable:$true] %s724
      %s726 = sshll.u32 %s5, 4
      %s727 = int_to_ptr.hbm [resolvable:$true] %s726
      %729 = dma.vmem_to_hbm [thread:$0]  %s725, 128, %s727, [#allocation4]
    $region25: #{tpu_custom_call.1} parent=1 // pred_fallthru
      _
    // Predicated region
    $region26: #{tpu_custom_call.1} parent=1 // pred_check
      _
    $region27: #{tpu_custom_call.1} parent=1 // pred_check_branch
      %731 = sbr.rel (0) target = $region29
    $region28: #{tpu_custom_call.1} parent=1 // pred_region
      %733 = dma.done [#allocation4], 128
    $region29: #{tpu_custom_call.1} parent=1 // pred_fallthru
      _
    %734 = vsyncpa [#allocation4], 1

</llo_original>
